<compile_context>
chip_gen: v6e
topology: v6e:2x2x1
jax: 0.10.0
libtpu: 0.0.40
codegen_flags: <defaults>
</compile_context>

<pallas_src>
import functools

import jax
import jax.numpy as jnp
from jax.experimental import pallas as pl
from jax.experimental.pallas import tpu as pltpu


def _round_up(v, m):
    return ((v + m - 1) // m) * m


# ---------------------------------------------------------------------------
# Generation-aware VMEM sizing.
# ---------------------------------------------------------------------------
_DEFAULT_VMEM_CAP = 64 * 1024 * 1024  # v7x per-TensorCore VMEM (most restrictive)


@functools.lru_cache(maxsize=1)
def _vmem_params():
    """Returns (per-step tile budget, scoped vmem_limit_bytes)."""
    cap = _DEFAULT_VMEM_CAP
    try:
        info = pltpu.get_tpu_info()
        cap = int(getattr(info, "vmem_capacity_bytes", cap))
    except Exception:
        pass
    if cap >= 128 * 1024 * 1024:            # v5e / v6e: 128 MiB VMEM
        return 48 * 1024 * 1024, 96 * 1024 * 1024
    return 20 * 1024 * 1024, 32 * 1024 * 1024   # v7x: 64 MiB VMEM


# ---------------------------------------------------------------------------
# One-time capability probe for pipeline_mode=pl.Buffered(1) (single buffering
# of a block whose index never changes).  Cached; real-kernel errors are NOT
# swallowed by this check.
# ---------------------------------------------------------------------------
@functools.lru_cache(maxsize=1)
def _buffered_one_supported():
    if not hasattr(pl, "Buffered"):
        return False
    try:
        def _k(x_ref, o_ref):
            o_ref[...] = x_ref[...]

        probe = pl.pallas_call(
            _k,
            out_shape=jax.ShapeDtypeStruct((8, 128), jnp.float32),
            grid=(1,),
            in_specs=[pl.BlockSpec((8, 128), lambda i: (0, 0),
                                   pipeline_mode=pl.Buffered(1))],
            out_specs=pl.BlockSpec((8, 128), lambda i: (0, 0)),
        )
        jax.jit(probe).lower(jnp.zeros((8, 128), jnp.float32)).compile()
        return True
    except Exception:
        return False


# ---------------------------------------------------------------------------
# Tiling.
# ---------------------------------------------------------------------------
def _choose_tiles(M, K, n_pad, x_bytes, w_bytes, out_bytes, tile_budget):
    """Pick (tm, tn): large, lane-dense tiles that fit the VMEM tile budget."""

    def tile_bytes(tm, tn):
        x_t = tm * K * x_bytes
        w_t = K * tn * w_bytes
        b_t = tn * 4
        o_t = tm * tn * out_bytes
        return 2 * (x_t + w_t + b_t + o_t)  # assume everything double-buffered

    # Row tile: as large as is useful; the grid handles a partial last block.
    if M < 128:
        tm = _round_up(max(M, 16), 16)      # multiple of 16 for bf16 packing
    else:
        tm = 128
        for cand in (256, 512, 1024, 2048):
            if M >= cand:
                tm = cand

    # Column tile: keep the whole (padded) N resident when it fits, otherwise
    # tile lane-dense chunks, preferring >=256 (MXU width on v6e/v7x).
    if tile_bytes(tm, n_pad) <= tile_budget:
        tn = n_pad
    else:
        tn = 256 if n_pad >= 256 else 128
        while tn * 2 <= n_pad and tile_bytes(tm, tn * 2) <= tile_budget:
            tn *= 2

    while tile_bytes(tm, tn) > tile_budget and tm > 128:
        tm //= 2
    return tm, tn


# ---------------------------------------------------------------------------
# Kernel body: one (tm, K) x (K, tn) tile, f32 MXU accumulation, bias add.
# The compute-dtype cast of x happens here (in-VMEM, hidden under DMA).
# ---------------------------------------------------------------------------
def _linear_bias_kernel(x_ref, w_ref, b_ref, o_ref):
    acc = jnp.dot(x_ref[...].astype(w_ref.dtype), w_ref[...],
                  preferred_element_type=jnp.float32)
    o_ref[...] = (acc + b_ref[...]).astype(o_ref.dtype)


@functools.partial(
    jax.jit,
    static_argnames=("tm", "tn", "swap", "single_buffer", "out_dtype"),
)
def _linear_impl(x2d, w_p, b_p, *, tm, tn, swap, single_buffer, out_dtype):
    M, K = x2d.shape
    n_pad = w_p.shape[1]
    grid_m = pl.cdiv(M, tm)
    grid_n = pl.cdiv(n_pad, tn)

    if swap:
        # n outer, m inner: weight column stays resident, x streams.
        grid = (grid_n, grid_m)
        x_map = lambda j, i: (i, 0)
        w_map = lambda j, i: (0, j)
        o_map = lambda j, i: (i, j)
    else:
        # m outer, n inner (default): x row tile stays resident.
        grid = (grid_m, grid_n)
        x_map = lambda i, j: (i, 0)
        w_map = lambda i, j: (0, j)
        o_map = lambda i, j: (i, j)

    if single_buffer:
        # Weight/bias block index never changes -> keep a single VMEM copy.
        w_spec = pl.BlockSpec((K, tn), w_map, pipeline_mode=pl.Buffered(1))
        b_spec = pl.BlockSpec((1, tn), w_map, pipeline_mode=pl.Buffered(1))
    else:
        w_spec = pl.BlockSpec((K, tn), w_map)
        b_spec = pl.BlockSpec((1, tn), w_map)

    x_bytes = x2d.dtype.itemsize
    w_bytes = w_p.dtype.itemsize
    o_bytes = jnp.dtype(out_dtype).itemsize
    x_reads = grid_n if (swap and grid_m > 1) else 1
    w_reads = grid_m if ((not swap) and grid_n > 1) else 1
    cost = pl.CostEstimate(
        flops=2 * M * K * n_pad,
        transcendentals=0,
        bytes_accessed=(x_reads * M * K * x_bytes
                        + w_reads * K * n_pad * w_bytes
                        + n_pad * 4
                        + M * n_pad * o_bytes),
    )

    _, vmem_limit = _vmem_params()

    return pl.pallas_call(
        _linear_bias_kernel,
        out_shape=jax.ShapeDtypeStruct((M, n_pad), out_dtype),
        grid_spec=pltpu.PrefetchScalarGridSpec(
            num_scalar_prefetch=0,
            grid=grid,
            in_specs=[
                pl.BlockSpec((tm, K), x_map),   # row tile of x (partial last ok)
                w_spec,                         # weight column tile
                b_spec,                         # bias row
            ],
            out_specs=pl.BlockSpec((tm, tn), o_map),
        ),
        compiler_params=pltpu.CompilerParams(
            dimension_semantics=("parallel", "parallel"),
            vmem_limit_bytes=vmem_limit,
        ),
        cost_estimate=cost,
    )(x2d, w_p, b_p)


# ---------------------------------------------------------------------------
# Wrappers.
# ---------------------------------------------------------------------------
def prepare_conv1d_params(w, b, compute_dtype=jnp.bfloat16):
    """Pad (K, N)/(N,) Conv1D params to a lane-dense N (multiple of 128) and
    cast the weight to the compute dtype.  Do this ONCE, not per call."""
    K, N = w.shape
    n_pad = _round_up(N, 128)
    wf = jnp.asarray(w)
    bf = jnp.asarray(b, dtype=jnp.float32)
    if n_pad != N:
        wf = jnp.pad(wf, ((0, 0), (0, n_pad - N)))
        bf = jnp.pad(bf, (0, n_pad - N))
    return wf.astype(jnp.dtype(compute_dtype)), bf.reshape(1, n_pad)


def linear_pallas(x2d, w_p, b_p, n_out, *, out_dtype=None):
    """y = x2d @ w_p[:, :n_out] + b_p[0, :n_out] with a Pallas TPU kernel.
    w_p/b_p must come from prepare_conv1d_params (lane-dense padded N)."""
    if out_dtype is None:
        out_dtype = x2d.dtype
    out_dtype = jnp.dtype(out_dtype)
    M, K = x2d.shape
    n_pad = w_p.shape[1]

    tile_budget, _ = _vmem_params()
    tm, tn = _choose_tiles(M, K, n_pad, x2d.dtype.itemsize,
                           w_p.dtype.itemsize, out_dtype.itemsize, tile_budget)
    grid_m = pl.cdiv(M, tm)
    grid_n = pl.cdiv(n_pad, tn)
    # v7x has 2 TensorCores: make sure a moderate-M problem gives them both work.
    if grid_m * grid_n == 1 and M >= 256:
        tm = _round_up((M + 1) // 2, 16)
        grid_m = pl.cdiv(M, tm)
    # If both axes are tiled, pick the loop order with less re-read traffic.
    swap = (grid_m > 1 and grid_n > 1
            and (grid_m - 1) * n_pad > (grid_n - 1) * M)
    single_buffer = (grid_n == 1) and _buffered_one_supported()

    y = _linear_impl(x2d, w_p, b_p, tm=tm, tn=tn, swap=swap,
                     single_buffer=single_buffer, out_dtype=out_dtype)
    if n_pad != n_out:
        y = y[:, :n_out]    # only needed when N is not already a multiple of 128
    return y


class PostProcessorPallas:
    """JAX/Pallas re-implementation of matformer's PostProcessor."""

    def __init__(self, n_embedding, clip_dim, embed_type, key,
                 compute_dtype=jnp.bfloat16, out_dtype=None):
        self.embed_type = embed_type
        self.n_embedding = n_embedding
        self.out_dtype = out_dtype          # None -> match input dtype
        if embed_type == "project":
            nx, nf = clip_dim, n_embedding      # Conv1D(n_embedding, clip_dim)
        elif embed_type == "project_resize":
            nx, nf = clip_dim, clip_dim         # Conv1D(clip_dim, clip_dim)
        else:
            raise ValueError(f"Unknown CLIP embedding preprocessing type: {embed_type}")
        # Conv1D init: normal(0, 0.02) weight of shape (nx, nf), zero bias.
        self.weight = (0.02 * jax.random.normal(key, (nx, nf))).astype(jnp.float32)
        self.bias = jnp.zeros((nf,), dtype=jnp.float32)
        self.n_out = nf
        # Pad + cast once (not per forward call).
        self._w_dev, self._b_dev = prepare_conv1d_params(
            self.weight, self.bias, compute_dtype)

    def __call__(self, x):
        lead = x.shape[:-1]
        x2d = x.reshape(-1, x.shape[-1])
        out_dtype = x.dtype if self.out_dtype is None else self.out_dtype
        y2d = linear_pallas(x2d, self._w_dev, self._b_dev, self.n_out,
                            out_dtype=out_dtype)
        y = y2d.reshape(*lead, self.n_out)
        if self.embed_type == "project_resize":
            y = y.reshape(*y.shape[:-1], -1, self.n_embedding)
        return y


def _reference(x, w, b, embed_type, n_embedding):
    y = jnp.einsum("...k,kn->...n", x, w,
                   precision=jax.lax.Precision.HIGHEST) + b
    if embed_type == "project_resize":
        y = y.reshape(*y.shape[:-1], -1, n_embedding)
    return y


if __name__ == "__main__":
    key = jax.random.PRNGKey(0)
    kx, kw1, kw2 = jax.random.split(key, 3)

    # Small shapes consistent with the module: (B, S, clip_dim) token embeddings.
    B, S, clip_dim, n_embedding = 2, 8, 64, 16
    x = jax.random.normal(kx, (B, S, clip_dim), dtype=jnp.float32)

    ok = True
    cases = [
        ("project", kw1, jnp.float32, 2e-3),        # strict-precision path
        ("project", kw1, jnp.bfloat16, 1e-2),       # default bf16 compute path
        ("project_resize", kw2, jnp.bfloat16, 1e-2),
    ]
    for embed_type, kw, cdt, tol in cases:
        mod = PostProcessorPallas(n_embedding, clip_dim, embed_type, kw,
                                  compute_dtype=cdt)
        out = mod(x)
        jax.block_until_ready(out)
        ref = _reference(x, mod.weight, mod.bias, embed_type, n_embedding)
        if out.shape != ref.shape:
            ok = False
        elif not jnp.allclose(out.astype(jnp.float32), ref, atol=tol, rtol=tol):
            ok = False

    print("KERNEL_OK" if ok else "KERNEL_MISMATCH")
</pallas_src>

<mosaic_0001>
module attributes {stable_mosaic.version = 11 : i64} {
  func.func @_linear_bias_kernel(%arg0: i32, %arg1: i32, %arg2: memref<16x64xf32, #tpu.memory_space<vmem>>, %arg3: memref<64x128xf32, #tpu.memory_space<vmem>>, %arg4: memref<1x128xf32, #tpu.memory_space<vmem>>, %arg5: memref<16x128xf32, #tpu.memory_space<vmem>>) attributes {dimension_semantics = [#tpu.dimension_semantics<parallel>, #tpu.dimension_semantics<parallel>], iteration_bounds = array<i64: 1, 1>, scalar_prefetch = 0 : i64, scratch_operands = 0 : i64, tpu.core_type = #tpu.core_type<tc>, window_params = [{transform_indices = @transform_0, window_bounds = array<i64: 16, 64>}, {transform_indices = @transform_1, window_bounds = array<i64: 64, 128>}, {transform_indices = @transform_2, window_bounds = array<i64: 1, 128>}, {transform_indices = @transform_3, window_bounds = array<i64: 16, 128>}]} {
    %c0 = arith.constant 0 : index
    %c0_0 = arith.constant 0 : index
    %0 = vector.load %arg2[%c0, %c0_0] : memref<16x64xf32, #tpu.memory_space<vmem>>, vector<16x64xf32>
    %c0_1 = arith.constant 0 : index
    %c0_2 = arith.constant 0 : index
    %1 = vector.load %arg3[%c0_1, %c0_2] : memref<64x128xf32, #tpu.memory_space<vmem>>, vector<64x128xf32>
    %cst = arith.constant dense<0.000000e+00> : vector<16x128xf32>
    %2 = tpu.matmul %0, %1, %cst {dimension_numbers = #tpu.dot_dimension_numbers<[1], [0], [0], [1], [0, 0, 1, 1], [], []>} : vector<16x64xf32>, vector<64x128xf32>, vector<16x128xf32> -> vector<16x128xf32>
    %c0_3 = arith.constant 0 : index
    %c0_4 = arith.constant 0 : index
    %3 = vector.load %arg4[%c0_3, %c0_4] : memref<1x128xf32, #tpu.memory_space<vmem>>, vector<1x128xf32>
    %4 = vector.broadcast %3 : vector<1x128xf32> to vector<16x128xf32>
    %5 = arith.addf %2, %4 : vector<16x128xf32>
    %c0_5 = arith.constant 0 : index
    %c0_6 = arith.constant 0 : index
    %6 = vector.load %arg5[%c0_5, %c0_6] : memref<16x128xf32, #tpu.memory_space<vmem>>, vector<16x128xf32>
    tpu.vector_store %arg5[%c0_5, %c0_6], %5 {strides = array<i32>} : memref<16x128xf32, #tpu.memory_space<vmem>>, vector<16x128xf32>,
    return
  }
  func.func @transform_0(%arg0: i32, %arg1: i32) -> (i32, i32) {
    %c0_i32 = arith.constant 0 : i32
    %c0_i32_0 = arith.constant 0 : i32
    return %arg0, %c0_i32 : i32, i32
  }
  func.func @transform_1(%arg0: i32, %arg1: i32) -> (i32, i32) {
    %c0_i32 = arith.constant 0 : i32
    %c0_i32_0 = arith.constant 0 : i32
    return %c0_i32, %arg1 : i32, i32
  }
  func.func @transform_2(%arg0: i32, %arg1: i32) -> (i32, i32) {
    %c0_i32 = arith.constant 0 : i32
    %c0_i32_0 = arith.constant 0 : i32
    return %c0_i32, %arg1 : i32, i32
  }
  func.func @transform_3(%arg0: i32, %arg1: i32) -> (i32, i32) {
    %c0_i32 = arith.constant 0 : i32
    return %arg0, %arg1 : i32, i32
  }
}

</mosaic_0001>

<llo_original>
// kernel: _linear_impl.1
$region0: #{_linear_impl.1}
  #allocation0 [shape = 'u32[]', space=smem, size = 0x4, offset = 0x4, fixed_abs, tag = 'smem constant byte address 0x4 - core index']
  #allocation1 [shape = 'u32[144,128]{1,0:T(1,128)}', space=vmem, size = 0x12000, scoped, tag = 'internal scratch']
  %s0 = inlined_call_operand.hbm [shape: f32[16,64], index: 0, kind: input, shape index: {}]
  %s1 = inlined_call_operand.hbm [shape: f32[64,128], index: 1, kind: input, shape index: {}]
  %s2 = inlined_call_operand.vmem [shape: f32[1,128], index: 2, kind: input, shape index: {}]
  %s3 = inlined_call_operand.hbm [shape: f32[16,128], index: 3, kind: output, shape index: {}]
  %s4 = sld [smem:[#allocation0]]
  $region30: #{_linear_impl.1} parent=0
    _
  %s6 = ssub.s32 1, %s4
  %s7 = scalar_select 0, %s6, %s4
  $region1: #{_linear_impl.1} parent=0
    #allocation2 [shape = 'u8[8192]{0}', space=vmem, size = 0x2000, scoped, tag = 'input window, operand 0, single buffered']
    #allocation3 [shape = 's32[1]{0}', space=sflag, size = 0x4, scoped, tag = 'scoped memory for _linear_impl.1']
    #allocation4 [shape = 's32[1]{0}', space=sflag, size = 0x4, scoped, tag = 'scoped memory for _linear_impl.1']
    #allocation5 [shape = 'u8[32768]{0}', space=vmem, size = 0x8000, scoped, tag = 'input window, operand 1, single buffered']
    #allocation6 [shape = 's32[1]{0}', space=sflag, size = 0x4, scoped, tag = 'scoped memory for _linear_impl.1']
    #allocation7 [shape = 'u8[8192]{0}', space=vmem, size = 0x2000, scoped, tag = 'output window, operand 0, single buffered']
    %8 = vsyncpa [#allocation3], 0
    %9 = vsyncpa [#allocation6], 0
    %10 = vsyncpa [#allocation4], 0
    // Predicated region
    $region2: #{_linear_impl.1} parent=1 // pred_check
      _
    $region3: #{_linear_impl.1} parent=1 // pred_check_branch
      %12 = sbr.rel (0) target = $region5
    $region4: #{_linear_impl.1} parent=1 // pred_region
      %s14 = ssub.s32 256, 256
      %15 = vsyncadd [#allocation3], %s14
      %s16 = sshll.u32 [#allocation2], 4
      %s17 = int_to_ptr.vmem [resolvable:$true] %s16
      %22 = dma.hbm_to_vmem [thread:$0]  %s0, 256, %s17, [#allocation3], 128, 128, 8
    $region5: #{_linear_impl.1} parent=1 // pred_fallthru
      _
    // Predicated region
    $region6: #{_linear_impl.1} parent=1 // pred_check
      _
    $region7: #{_linear_impl.1} parent=1 // pred_check_branch
      %24 = sbr.rel (0) target = $region9
    $region8: #{_linear_impl.1} parent=1 // pred_region
      %s26 = ssub.s32 1024, 1024
      %27 = vsyncadd [#allocation6], %s26
      %s28 = sshll.u32 [#allocation5], 4
      %s29 = int_to_ptr.vmem [resolvable:$true] %s28
      %34 = dma.hbm_to_vmem [thread:$0]  %s1, 1024, %s29, [#allocation6], 128, 128, 8
    $region9: #{_linear_impl.1} parent=1 // pred_fallthru
      _
    // Predicated region
    $region10: #{_linear_impl.1} parent=1 // pred_check
      _
    $region11: #{_linear_impl.1} parent=1 // pred_check_branch
      %36 = sbr.rel (0) target = $region13
    $region12: #{_linear_impl.1} parent=1 // pred_region
      _
    $region13: #{_linear_impl.1} parent=1 // pred_fallthru
      _
    // Predicated region
    $region14: #{_linear_impl.1} parent=1 // pred_check
      _
    $region15: #{_linear_impl.1} parent=1 // pred_check_branch
      %38 = sbr.rel (0) target = $region17
    $region16: #{_linear_impl.1} parent=1 // pred_region
      %39 = dma.done [#allocation3], 256
    $region17: #{_linear_impl.1} parent=1 // pred_fallthru
      _
    // Predicated region
    $region18: #{_linear_impl.1} parent=1 // pred_check
      _
    $region19: #{_linear_impl.1} parent=1 // pred_check_branch
      %41 = sbr.rel (0) target = $region21
    $region20: #{_linear_impl.1} parent=1 // pred_region
      %42 = dma.done [#allocation6], 1024
    $region21: #{_linear_impl.1} parent=1 // pred_fallthru
      _
    %v43 = vld [vmem:[#allocation2] sm:$0xff]
    %v44 = vld [vmem:[#allocation2 + $0x8] sm:$0xff]
    %v45 = vld [vmem:[#allocation5] sm:$0xff]
    %v46 = vld [vmem:[#allocation5 + $0x8] sm:$0xff]
    %v47 = vld [vmem:[#allocation5 + $0x10] sm:$0xff]
    %v48 = vld [vmem:[#allocation5 + $0x18] sm:$0xff]
    %v49 = vld [vmem:[#allocation5 + $0x20] sm:$0xff]
    %v50 = vld [vmem:[#allocation5 + $0x28] sm:$0xff]
    %v51 = vld [vmem:[#allocation5 + $0x30] sm:$0xff]
    %v52 = vld [vmem:[#allocation5 + $0x38] sm:$0xff]
    %v53 = vld [vmem:[%s2] sm:$0x1]
    %v55 = vlaneseq
    %v56 = vshrl.u32 %v55, 7
    %v57 = vsub.s32 0, %v56
    %v58 = vrot.slane %v53, %v57
    %vm60 = vcmask 523264
    %v62 = vsel %vm60, %v43, 0
    %v65 = vsel %vm60, %v44, 0
    %67 = vmatprep.subr.mxu0 0.0
    %68 = vmatpush1.msra.mxu0 0.0
    %69 = vmatprep.subr.mxu0 0.0
    %70 = vmatpush1.msra.mxu0 0.0
    %71 = vmatprep.subr.mxu0 0.0
    %72 = vmatpush1.msra.mxu0 0.0
    %73 = vmatprep.subr.mxu0 0.0
    %74 = vmatpush1.msra.mxu0 0.0
    %75 = vmatprep.subr.mxu0 0.0
    %76 = vmatpush1.msra.mxu0 0.0
    %77 = vmatprep.subr.mxu0 0.0
    %78 = vmatpush1.msra.mxu0 0.0
    %79 = vmatprep.subr.mxu0 0.0
    %80 = vmatpush1.msra.mxu0 0.0
    %81 = vmatprep.subr.mxu0 0.0
    %82 = vmatpush1.msra.mxu0 0.0
    %83 = vmatprep.subr.mxu0 0.0
    %84 = vmatpush1.msra.mxu0 %v52
    %85 = vmatprep.subr.mxu0 0.0
    %86 = vmatpush1.msra.mxu0 %v51
    %87 = vmatprep.subr.mxu0 0.0
    %88 = vmatpush1.msra.mxu0 %v50
    %89 = vmatprep.subr.mxu0 0.0
    %90 = vmatpush1.msra.mxu0 %v49
    %91 = vmatprep.subr.mxu0 0.0
    %92 = vmatpush1.msra.mxu0 %v48
    %93 = vmatprep.subr.mxu0 0.0
    %94 = vmatpush1.msra.mxu0 %v47
    %95 = vmatprep.subr.mxu0 0.0
    %96 = vmatpush1.msra.mxu0 %v46
    %97 = vmatprep.subr.mxu0 0.0
    %98 = vmatpush1.msra.mxu0 %v45
    %99 = vmatprep.subr.mxu0 0.0
    %100 = vmatpush2.msra.mxu0 0.0
    %101 = vmatprep.subr.mxu0 0.0
    %102 = vmatpush2.msra.mxu0 0.0
    %103 = vmatprep.subr.mxu0 0.0
    %104 = vmatpush2.msra.mxu0 0.0
    %105 = vmatprep.subr.mxu0 0.0
    %106 = vmatpush2.msra.mxu0 0.0
    %107 = vmatprep.subr.mxu0 0.0
    %108 = vmatpush2.msra.mxu0 0.0
    %109 = vmatprep.subr.mxu0 0.0
    %110 = vmatpush2.msra.mxu0 0.0
    %111 = vmatprep.subr.mxu0 0.0
    %112 = vmatpush2.msra.mxu0 0.0
    %113 = vmatprep.subr.mxu0 0.0
    %114 = vmatpush2.msra.mxu0 0.0
    %115 = vmatprep.subr.mxu0 0.0
    %116 = vmatpush2.msra.mxu0 0.0
    %117 = vmatprep.subr.mxu0 0.0
    %118 = vmatpush2.msra.mxu0 0.0
    %119 = vmatprep.subr.mxu0 0.0
    %120 = vmatpush2.msra.mxu0 0.0
    %121 = vmatprep.subr.mxu0 0.0
    %122 = vmatpush2.msra.mxu0 0.0
    %123 = vmatprep.subr.mxu0 0.0
    %124 = vmatpush2.msra.mxu0 0.0
    %125 = vmatprep.subr.mxu0 0.0
    %126 = vmatpush2.msra.mxu0 0.0
    %127 = vmatprep.subr.mxu0 0.0
    %128 = vmatpush2.msra.mxu0 0.0
    %129 = vmatprep.subr.mxu0 0.0
    %130 = vmatpush2.msra.mxu0 0.0
    %131 = vmatprep.mubr.f32.mxu0 0.0
    %132 = vmatmul.mubr.f32.gmra.mxu0 %v62
    %v133 = vpop.f32.mrf.mxu0
    %v134 = vadd.f32 %v58, %v133
    %v135 = vpop.f32.mrf.mxu0
    %136 = vmatprep.mubr.f32.mxu0 0.0
    %137 = vmatmul.mubr.f32.gmra.mxu0 %v65
    %v138 = vpop.f32.mrf.mxu0
    %v139 = vadd.f32 %v58, %v138
    %v140 = vpop.f32.mrf.mxu0
    %141 = vdwg.mxu0
    %142 = vst [vmem:[#allocation7] sm:$0xff] %v134
    %143 = vst [vmem:[#allocation7 + $0x8] sm:$0xff] %v139
    // Predicated region
    $region22: #{_linear_impl.1} parent=1 // pred_check
      _
    $region23: #{_linear_impl.1} parent=1 // pred_check_branch
      %145 = sbr.rel (0) target = $region25
    $region24: #{_linear_impl.1} parent=1 // pred_region
      %s147 = ssub.s32 256, 256
      %148 = vsyncadd [#allocation4], %s147
      %s149 = sshll.u32 [#allocation7], 4
      %s150 = int_to_ptr.vmem [resolvable:$true] %s149
      %155 = dma.vmem_to_hbm [thread:$0]  %s150, 256, %s3, [#allocation4], 128, 128, 8
    $region25: #{_linear_impl.1} parent=1 // pred_fallthru
      _
    // Predicated region
    $region26: #{_linear_impl.1} parent=1 // pred_check
      _
    $region27: #{_linear_impl.1} parent=1 // pred_check_branch
      %157 = sbr.rel (0) target = $region29
    $region28: #{_linear_impl.1} parent=1 // pred_region
      %158 = dma.done [#allocation4], 256
    $region29: #{_linear_impl.1} parent=1 // pred_fallthru
      _
    %159 = vsyncpa [#allocation3], 1
    %160 = vsyncpa [#allocation6], 1
    %161 = vsyncpa [#allocation4], 1

</llo_original>
